<compile_context>
chip_gen: v5e
topology: v5e:2x2
jax: 0.10.0
libtpu: 0.0.40
codegen_flags: <defaults>
</compile_context>

<pallas_src>
import jax
import jax.numpy as jnp
from jax import lax
from jax.experimental import pallas as pl
from jax.experimental.pallas import tpu as pltpu


def _attention_kernel(z_ref, w1_ref, b1_ref, w2t_ref, o_ref):
    # z_ref  : (TM, in_size)   VMEM (streamed tile of rows, native dtype)
    # w1_ref : (in_size, H)    VMEM (resident across grid, z.dtype)
    # b1_ref : (1, H)          VMEM (resident, f32)
    # w2t_ref: (1, H)          VMEM (second Linear weight, transposed, f32)
    # o_ref  : (1, 1, TM)      VMEM (lane-dense output tile)
    z = z_ref[...]
    # First projection on the MXU with f32 accumulation.
    h = jnp.dot(z, w1_ref[...], preferred_element_type=jnp.float32)   # (TM, H)
    h = jnp.tanh(h + b1_ref[...])                                     # (TM, H), EUP tanh
    # Second projection: contract (1, H) with (TM, H) along H -> (1, TM).
    # Lane-dense result; no (TM, 1) masked column stores.
    s = lax.dot_general(
        w2t_ref[...], h,
        dimension_numbers=(((1,), (1,)), ((), ())),
        preferred_element_type=jnp.float32,
    )                                                                 # (1, TM)
    o_ref[...] = s.reshape(o_ref.shape).astype(o_ref.dtype)


def _round_up(a, b):
    return ((a + b - 1) // b) * b


def attention_forward(z, w1, b1, w2, *, tile_m=512):
    """z: (..., in_size); w1: (in_size, H); b1: (H,); w2: (H, 1) -> (..., 1)."""
    in_size = z.shape[-1]
    hidden = w1.shape[-1]
    lead = z.shape[:-1]
    m = 1
    for d in lead:
        m *= d

    # Row tile: multiple of 8 sublanes, capped at tile_m; pad M so every block
    # is fully in-bounds (ragged tail handled by padding, sliced off below).
    tm = min(tile_m, _round_up(max(m, 1), 8))
    m_pad = _round_up(max(m, 1), tm)
    num_tiles = m_pad // tm

    z2 = z.reshape(m, in_size)
    if m_pad != m:
        z2 = jnp.pad(z2, ((0, m_pad - m), (0, 0)))

    # MXU operands in z's dtype (bf16 path streams half the bytes); small
    # constants pre-cast to f32 once so the kernel body does no per-step casts.
    w1_c = w1.astype(z.dtype)
    b1_2d = b1.reshape(1, hidden).astype(jnp.float32)
    w2t = w2.reshape(hidden, 1).T.astype(jnp.float32)  # (1, H)

    out = pl.pallas_call(
        _attention_kernel,
        out_shape=jax.ShapeDtypeStruct((num_tiles, 1, tm), z.dtype),
        grid=(num_tiles,),
        in_specs=[
            pl.BlockSpec((tm, in_size), lambda i: (i, 0)),       # streamed rows
            pl.BlockSpec((in_size, hidden), lambda i: (0, 0)),   # resident weights
            pl.BlockSpec((1, hidden), lambda i: (0, 0)),
            pl.BlockSpec((1, hidden), lambda i: (0, 0)),
        ],
        out_specs=pl.BlockSpec((1, 1, tm), lambda i: (i, 0, 0)),
        compiler_params=pltpu.CompilerParams(
            dimension_semantics=("parallel",),
        ),
    )(z2, w1_c, b1_2d, w2t)

    return out.reshape(m_pad)[:m].reshape(*lead, 1)


def init_params(key, in_size, hidden_size=16, dtype=jnp.float32):
    """Deterministic init mimicking nn.Linear default (uniform +/- 1/sqrt(fan_in))."""
    k1, k2, k3 = jax.random.split(key, 3)
    bound1 = 1.0 / (in_size ** 0.5)
    bound2 = 1.0 / (hidden_size ** 0.5)
    # Stored transposed relative to torch (torch weight is (out, in)); here (in, out).
    w1 = jax.random.uniform(k1, (in_size, hidden_size), dtype, -bound1, bound1)
    b1 = jax.random.uniform(k2, (hidden_size,), dtype, -bound1, bound1)
    w2 = jax.random.uniform(k3, (hidden_size, 1), dtype, -bound2, bound2)
    return w1, b1, w2


if __name__ == "__main__":
    key = jax.random.PRNGKey(0)
    k_params, k_z, k_z2 = jax.random.split(key, 3)

    batch, views, in_size, hidden = 2, 8, 32, 16
    w1, b1, w2 = init_params(k_params, in_size, hidden)

    # Small single-tile case (matches the module's typical use).
    z = jax.random.normal(k_z, (batch, views, in_size), jnp.float32)
    w = attention_forward(z, w1, b1, w2)
    w = jax.block_until_ready(w)
    ref = jnp.tanh(z @ w1 + b1) @ w2
    assert w.shape == (batch, views, 1)
    assert jnp.allclose(w, ref, atol=1e-5, rtol=1e-5)

    # Multi-tile + ragged-tail case (exercises tiling, padding, parallel grid).
    z_big = jax.random.normal(k_z2, (3, 350, in_size), jnp.float32)  # M=1050 -> 3 tiles of 512
    w_big = attention_forward(z_big, w1, b1, w2)
    w_big = jax.block_until_ready(w_big)
    ref_big = jnp.tanh(z_big @ w1 + b1) @ w2
    assert w_big.shape == (3, 350, 1)
    assert jnp.allclose(w_big, ref_big, atol=1e-5, rtol=1e-5)

    # bf16 streaming path (MXU in bf16, f32 accumulate / tanh).
    z_bf16 = z.astype(jnp.bfloat16)
    w_bf16 = attention_forward(z_bf16, w1, b1, w2)
    w_bf16 = jax.block_until_ready(w_bf16)
    ref_bf16 = (jnp.tanh(z_bf16.astype(jnp.float32) @ w1.astype(jnp.bfloat16).astype(jnp.float32) + b1)
                @ w2)
    assert w_bf16.shape == (batch, views, 1)
    assert jnp.allclose(w_bf16.astype(jnp.float32), ref_bf16, atol=2e-2, rtol=2e-2)

    print("KERNEL_OK")
</pallas_src>

<mosaic_0001>
module attributes {stable_mosaic.version = 11 : i64} {
  func.func @_attention_kernel(%arg0: i32, %arg1: memref<16x32xf32, #tpu.memory_space<vmem>>, %arg2: memref<32x16xf32, #tpu.memory_space<vmem>>, %arg3: memref<1x16xf32, #tpu.memory_space<vmem>>, %arg4: memref<1x16xf32, #tpu.memory_space<vmem>>, %arg5: memref<1x1x16xf32, #tpu.memory_space<vmem>>) attributes {dimension_semantics = [#tpu.dimension_semantics<parallel>], iteration_bounds = array<i64: 1>, scalar_prefetch = 0 : i64, scratch_operands = 0 : i64, tpu.core_type = #tpu.core_type<tc>, window_params = [{transform_indices = @transform_0, window_bounds = array<i64: 16, 32>}, {pipeline_mode = #tpu.pipeline_mode<synchronous>, transform_indices = @transform_1, window_bounds = array<i64: 32, 16>}, {pipeline_mode = #tpu.pipeline_mode<synchronous>, transform_indices = @transform_2, window_bounds = array<i64: 1, 16>}, {pipeline_mode = #tpu.pipeline_mode<synchronous>, transform_indices = @transform_3, window_bounds = array<i64: 1, 16>}, {transform_indices = @transform_4, window_bounds = array<i64: 1, 1, 16>}]} {
    %c0 = arith.constant 0 : index
    %c0_0 = arith.constant 0 : index
    %0 = vector.load %arg1[%c0, %c0_0] : memref<16x32xf32, #tpu.memory_space<vmem>>, vector<16x32xf32>
    %c0_1 = arith.constant 0 : index
    %c0_2 = arith.constant 0 : index
    %1 = vector.load %arg2[%c0_1, %c0_2] : memref<32x16xf32, #tpu.memory_space<vmem>>, vector<32x16xf32>
    %cst = arith.constant dense<0.000000e+00> : vector<16x16xf32>
    %2 = tpu.matmul %0, %1, %cst {dimension_numbers = #tpu.dot_dimension_numbers<[1], [0], [0], [1], [0, 0, 1, 1], [], []>} : vector<16x32xf32>, vector<32x16xf32>, vector<16x16xf32> -> vector<16x16xf32>
    %c0_3 = arith.constant 0 : index
    %c0_4 = arith.constant 0 : index
    %3 = vector.load %arg3[%c0_3, %c0_4] : memref<1x16xf32, #tpu.memory_space<vmem>>, vector<1x16xf32>
    %4 = vector.broadcast %3 : vector<1x16xf32> to vector<16x16xf32>
    %5 = arith.addf %2, %4 : vector<16x16xf32>
    %6 = math.tanh %5 : vector<16x16xf32>
    %c0_5 = arith.constant 0 : index
    %c0_6 = arith.constant 0 : index
    %7 = vector.load %arg4[%c0_5, %c0_6] : memref<1x16xf32, #tpu.memory_space<vmem>>, vector<1x16xf32>
    %cst_7 = arith.constant dense<0.000000e+00> : vector<1x16xf32>
    %8 = tpu.matmul %7, %6, %cst_7 {dimension_numbers = #tpu.dot_dimension_numbers<[1], [1], [0], [0], [0, 0, 1, 0], [], []>} : vector<1x16xf32>, vector<16x16xf32>, vector<1x16xf32> -> vector<1x16xf32>
    %9 = vector.shape_cast %8 : vector<1x16xf32> to vector<1x1x16xf32>
    %c0_8 = arith.constant 0 : index
    %c0_9 = arith.constant 0 : index
    %c0_10 = arith.constant 0 : index
    %10 = vector.load %arg5[%c0_8, %c0_9, %c0_10] : memref<1x1x16xf32, #tpu.memory_space<vmem>>, vector<1x1x16xf32>
    tpu.vector_store %arg5[%c0_8, %c0_9, %c0_10], %9 {strides = array<i32>} : memref<1x1x16xf32, #tpu.memory_space<vmem>>, vector<1x1x16xf32>,
    return
  }
  func.func @transform_0(%arg0: i32) -> (i32, i32) {
    %c0_i32 = arith.constant 0 : i32
    %c0_i32_0 = arith.constant 0 : i32
    return %arg0, %c0_i32 : i32, i32
  }
  func.func @transform_1(%arg0: i32) -> (i32, i32) {
    %c0_i32 = arith.constant 0 : i32
    %c0_i32_0 = arith.constant 0 : i32
    %c0_i32_1 = arith.constant 0 : i32
    return %c0_i32, %c0_i32_0 : i32, i32
  }
  func.func @transform_2(%arg0: i32) -> (i32, i32) {
    %c0_i32 = arith.constant 0 : i32
    %c0_i32_0 = arith.constant 0 : i32
    %c0_i32_1 = arith.constant 0 : i32
    return %c0_i32, %c0_i32_0 : i32, i32
  }
  func.func @transform_3(%arg0: i32) -> (i32, i32) {
    %c0_i32 = arith.constant 0 : i32
    %c0_i32_0 = arith.constant 0 : i32
    %c0_i32_1 = arith.constant 0 : i32
    return %c0_i32, %c0_i32_0 : i32, i32
  }
  func.func @transform_4(%arg0: i32) -> (i32, i32, i32) {
    %c0_i32 = arith.constant 0 : i32
    %c0_i32_0 = arith.constant 0 : i32
    %c0_i32_1 = arith.constant 0 : i32
    return %arg0, %c0_i32, %c0_i32_0 : i32, i32, i32
  }
}

</mosaic_0001>

<llo_original>
// kernel: tpu_custom_call.1
$region0: #{tpu_custom_call.1}
  #allocation0 [shape = 'u32[]', space=smem, size = 0x4, offset = 0x4, fixed_abs, tag = 'smem constant byte address 0x4 - core index']
  #allocation1 [shape = 'u32[72,128]{1,0:T(1,128)}', space=vmem, size = 0x9000, scoped, tag = 'internal scratch']
  %s0 = inlined_call_operand.vmem [shape: f32[16,32], index: 0, kind: input, shape index: {}]
  %s1 = inlined_call_operand.vmem [shape: f32[32,16], index: 1, kind: input, shape index: {}]
  %s2 = inlined_call_operand.vmem [shape: f32[1,16], index: 2, kind: input, shape index: {}]
  %s3 = inlined_call_operand.vmem [shape: f32[1,16], index: 3, kind: input, shape index: {}]
  %s4 = inlined_call_operand.hbm [shape: f32[1,1,16], index: 4, kind: output, shape index: {}]
  %s5 = sld [smem:[#allocation0]]
  $region26: #{tpu_custom_call.1} parent=0
    _
  %s7 = ssub.s32 1, %s5
  %s8 = scalar_select 0, %s7, %s5
  $region1: #{tpu_custom_call.1} parent=0
    #allocation2 [shape = 'u8[512]{0}', space=vmem, size = 0x400, scoped, tag = 'output window, operand 0, single buffered']
    #allocation3 [shape = 's32[1]{0}', space=sflag, size = 0x4, scoped, tag = 'scoped memory for tpu_custom_call.1']
    %9 = vsyncpa [#allocation3], 0
    // Predicated region
    $region2: #{tpu_custom_call.1} parent=1 // pred_check
      _
    $region3: #{tpu_custom_call.1} parent=1 // pred_check_branch
      %11 = sbr.rel (0) target = $region5
    $region4: #{tpu_custom_call.1} parent=1 // pred_region
      _
    $region5: #{tpu_custom_call.1} parent=1 // pred_fallthru
      _
    // Predicated region
    $region6: #{tpu_custom_call.1} parent=1 // pred_check
      _
    $region7: #{tpu_custom_call.1} parent=1 // pred_check_branch
      %13 = sbr.rel (0) target = $region9
    $region8: #{tpu_custom_call.1} parent=1 // pred_region
      _
    $region9: #{tpu_custom_call.1} parent=1 // pred_fallthru
      _
    // Predicated region
    $region10: #{tpu_custom_call.1} parent=1 // pred_check
      _
    $region11: #{tpu_custom_call.1} parent=1 // pred_check_branch
      %15 = sbr.rel (0) target = $region13
    $region12: #{tpu_custom_call.1} parent=1 // pred_region
      _
    $region13: #{tpu_custom_call.1} parent=1 // pred_fallthru
      _
    // Predicated region
    $region14: #{tpu_custom_call.1} parent=1 // pred_check
      _
    $region15: #{tpu_custom_call.1} parent=1 // pred_check_branch
      %17 = sbr.rel (0) target = $region17
    $region16: #{tpu_custom_call.1} parent=1 // pred_region
      _
    $region17: #{tpu_custom_call.1} parent=1 // pred_fallthru
      _
    %v18 = vld [vmem:[%s0] sm:$0xff]
    %v19 = vld [vmem:[%s0 + $0x8] sm:$0xff]
    %v20 = vld [vmem:[%s1] sm:$0xff]
    %v21 = vld [vmem:[%s1 + $0x8] sm:$0xff]
    %v22 = vld [vmem:[%s1 + $0x10] sm:$0xff]
    %v23 = vld [vmem:[%s1 + $0x18] sm:$0xff]
    %v24 = vld [vmem:[%s2] sm:$0x1]
    %v26 = vperm.slane %v24, 0
    %vm28 = vcmask 261120
    %v30 = vsel %vm28, %v18, 0
    %v33 = vsel %vm28, %v19, 0
    %35 = vmatpush.msra.mxu0 0.0
    %36 = vmatpush.msra.mxu0 0.0
    %37 = vmatpush.msra.mxu0 0.0
    %38 = vmatpush.msra.mxu0 0.0
    %39 = vmatpush.msra.mxu0 0.0
    %40 = vmatpush.msra.mxu0 0.0
    %41 = vmatpush.msra.mxu0 0.0
    %42 = vmatpush.msra.mxu0 0.0
    %43 = vmatpush.msra.mxu0 0.0
    %44 = vmatpush.msra.mxu0 0.0
    %45 = vmatpush.msra.mxu0 0.0
    %46 = vmatpush.msra.mxu0 0.0
    %47 = vmatpush.msra.mxu0 %v23
    %48 = vmatpush.msra.mxu0 %v22
    %49 = vmatpush.msra.mxu0 %v21
    %50 = vmatpush.msra.mxu0 %v20
    %51 = vmatmul.f32.gmra.mxu0 %v30
    %v52 = vpop.f32.mrf.mxu0
    %v53 = vadd.f32 %v26, %v52
    %54 = vmatmul.f32.gmra.mxu0 %v33
    %v55 = vpop.f32.mrf.mxu0
    %v56 = vadd.f32 %v26, %v55
    %57 = vdwg.mxu0
    %v58 = vtanh.pop %v53
    %v59 = vtanh.pop %v56
    %v60 = vld [vmem:[%s3] sm:$0x1]
    %vm61 = vcmask 130048
    %v63 = vsel %vm61, %v60, 0
    %v66 = vsel %vm61, %v58, 0
    %v69 = vsel %vm61, %v59, 0
    %71 = vmatpush.xpose.msra.mxu0 0.0
    %72 = vmatpush.xpose.msra.mxu0 0.0
    %73 = vmatpush.xpose.msra.mxu0 0.0
    %74 = vmatpush.xpose.msra.mxu0 0.0
    %75 = vmatpush.xpose.msra.mxu0 0.0
    %76 = vmatpush.xpose.msra.mxu0 0.0
    %77 = vmatpush.xpose.msra.mxu0 0.0
    %78 = vmatpush.xpose.msra.mxu0 0.0
    %79 = vmatpush.xpose.msra.mxu0 0.0
    %80 = vmatpush.xpose.msra.mxu0 0.0
    %81 = vmatpush.xpose.msra.mxu0 0.0
    %82 = vmatpush.xpose.msra.mxu0 0.0
    %83 = vmatpush.xpose.msra.mxu0 0.0
    %84 = vmatpush.xpose.msra.mxu0 0.0
    %85 = vmatpush.xpose.msra.mxu0 %v69
    %86 = vmatpush.xpose.msra.mxu0 %v66
    %87 = vmatmul.f32.gmra.mxu0 %v63
    %v88 = vpop.f32.mrf.mxu0
    %v89 = vadd.f32 0.0, %v88
    %90 = vdwg.mxu0
    %vm91 = vcmask 122880
    %92 = vst.msk [vmem:[#allocation2] sm:$0x1] %vm91, %v89
    // Predicated region
    $region18: #{tpu_custom_call.1} parent=1 // pred_check
      _
    $region19: #{tpu_custom_call.1} parent=1 // pred_check_branch
      %94 = sbr.rel (0) target = $region21
    $region20: #{tpu_custom_call.1} parent=1 // pred_region
      %96 = vsyncadd [#allocation3], 0
      %s98 = sshll.u32 [#allocation2], 4
      %s99 = int_to_ptr.vmem [resolvable:$true] %s98
      %s100 = sshll.u32 %s4, 4
      %s101 = int_to_ptr.hbm [resolvable:$true] %s100
      %103 = dma.vmem_to_hbm [thread:$0]  %s99, 16, %s101, [#allocation3]
    $region21: #{tpu_custom_call.1} parent=1 // pred_fallthru
      _
    // Predicated region
    $region22: #{tpu_custom_call.1} parent=1 // pred_check
      _
    $region23: #{tpu_custom_call.1} parent=1 // pred_check_branch
      %105 = sbr.rel (0) target = $region25
    $region24: #{tpu_custom_call.1} parent=1 // pred_region
      %107 = dma.done [#allocation3], 16
    $region25: #{tpu_custom_call.1} parent=1 // pred_fallthru
      _
    %108 = vsyncpa [#allocation3], 1

</llo_original>
